<compile_context>
chip_gen: v7x
topology: tpu7x:2x2x1
jax: 0.10.0
libtpu: 0.0.40
codegen_flags: <defaults>
</compile_context>

<pallas_src>
import functools

import jax
import jax.numpy as jnp
from jax.experimental import pallas as pl
from jax.experimental.pallas import tpu as pltpu


def _attention_kernel(emb_ref, w_ref, b_ref, out_ref, *, matmul_dtype):
    e = emb_ref[...]          # (n, n)    f32, this graph's embedding
    w = w_ref[...]            # (f, n, n) f32, resident across the whole grid
    b_row = b_ref[...]        # (1, f)    f32, lane-dense bias row

    # Fold the mean over j into the weights (exact: mean and matmul are linear):
    #   Wm[k, m] = mean_j W[k, m, j]        -- XLU cross-lane reduce, no MXU.
    # Recomputed every grid step on purpose: it is the same order of work as
    # the single matmul below, and caching it in scratch would be unsafe when
    # the "parallel" batch axis is sharded across v7x's two TensorCores.
    wm = jnp.mean(w, axis=2)                                        # (f, n)

    e_mm = e.astype(matmul_dtype)
    wm_mm = wm.astype(matmul_dtype)

    # gT[i, k] = sum_m e[i, m] * Wm[k, m]   -- one 2-D MXU matmul, (n, f) layout.
    gT = jnp.einsum('im,km->ik', e_mm, wm_mm,
                    preferred_element_type=jnp.float32)             # (n, f)

    # sigmoid_scores (transposed): sT[i, k] = sigmoid(gT[i, k] + bias[k])
    sT = jax.nn.sigmoid(gT + b_row)                                 # (n, f)

    # r1T[i, k] = sum_m e[i, m] * sT[m, k]  -- second MXU matmul, f32 accumulate.
    r1T = jnp.dot(e_mm, sT.astype(matmul_dtype),
                  preferred_element_type=jnp.float32)               # (n, f)

    # out[k] = sum_i sT[i, k] * r1T[i, k]   -- sublane reduce, lane-dense store.
    out_ref[...] = jnp.sum(sT * r1T, axis=0, keepdims=True)         # (1, f)


def attention_module_forward(embedding, weight_matrix, bias, *,
                             matmul_dtype=jnp.float32):
    """SimGNN AttentionModule forward.

    embedding:     (n, n) for one graph, or (B, n, n) for a batch of graphs.
    weight_matrix: (f, n, n)
    bias:          (f, 1)
    returns:       (f, 1) or (B, f, 1), matching `representation.view(-1, 1)`.

    Pass matmul_dtype=jnp.bfloat16 for large n (halves MXU passes / VMEM
    footprint of the matmul inputs; accumulation stays f32).
    """
    squeeze = embedding.ndim == 2
    if squeeze:
        embedding = embedding[None]
    batch, n, _ = embedding.shape
    f = weight_matrix.shape[0]

    # Lane-dense bias row (layout plumbing only).
    bias_row = bias.reshape(1, f).astype(jnp.float32)

    kernel = functools.partial(_attention_kernel, matmul_dtype=matmul_dtype)

    # NOTE on VMEM (v7x has 64 MiB): the whole (f, n, n) weight block stays
    # resident via a constant index map, which is fine at these shapes.  For
    # very large n, tile the filter axis onto the grid (or fold Wm once up
    # front) instead of keeping all of W resident.
    out = pl.pallas_call(
        kernel,
        out_shape=jax.ShapeDtypeStruct((batch, 1, f), jnp.float32),
        grid=(batch,),
        in_specs=[
            pl.BlockSpec((None, n, n), lambda b: (b, 0, 0)),    # embedding[b]
            pl.BlockSpec((f, n, n), lambda b: (0, 0, 0)),       # W, resident
            pl.BlockSpec((1, f), lambda b: (0, 0)),             # bias row
        ],
        out_specs=pl.BlockSpec((None, 1, f), lambda b: (b, 0, 0)),
        compiler_params=pltpu.CompilerParams(
            dimension_semantics=("parallel",)),                 # v7x megacore
    )(embedding, weight_matrix, bias_row)                       # (B, 1, f)

    out = out.reshape(batch, f, 1)                              # (B, f, 1)
    return out[0] if squeeze else out


def _reference(embedding, weight_matrix, bias):
    """Pure-JAX reference mirroring the PyTorch forward exactly (f32)."""
    hi = jax.lax.Precision.HIGHEST
    m = jnp.einsum('im,kmj->kij', embedding, weight_matrix, precision=hi)
    g = jnp.mean(m, axis=2)                                     # (f, n)
    s = jax.nn.sigmoid(g + bias)                                # (f, n)
    r1 = jnp.einsum('im,km->ki', embedding, s, precision=hi)    # (f, n)
    return jnp.sum(s * r1, axis=1, keepdims=True)               # (f, 1)


if __name__ == "__main__":
    n, f, batch = 16, 8, 4

    key = jax.random.PRNGKey(0)
    k_emb, k_w, k_b = jax.random.split(key, 3)

    embeddings = jax.random.normal(k_emb, (batch, n, n), dtype=jnp.float32)
    weight_matrix = jax.random.normal(k_w, (f, n, n), dtype=jnp.float32)
    bias = jax.random.normal(k_b, (f, 1), dtype=jnp.float32)

    # 1) Single-graph path (exact module interface), f32 MXU path, tight check.
    out1 = jax.block_until_ready(
        attention_module_forward(embeddings[0], weight_matrix, bias))
    ref1 = _reference(embeddings[0], weight_matrix, bias)
    assert out1.shape == (f, 1), out1.shape
    assert jnp.allclose(out1, ref1, rtol=1e-5, atol=2e-4), (out1, ref1)

    # 2) Batched path (grid over graphs amortizes launch overhead), f32, tight.
    outB = jax.block_until_ready(
        attention_module_forward(embeddings, weight_matrix, bias))
    refB = jnp.stack([_reference(embeddings[b], weight_matrix, bias)
                      for b in range(batch)])
    assert outB.shape == (batch, f, 1), outB.shape
    assert jnp.allclose(outB, refB, rtol=1e-5, atol=2e-4), (outB, refB)

    # 3) bf16 MXU-input path (the large-n configuration); tolerance reflects
    #    bf16 input rounding (~2^-9 relative) with f32 accumulation.
    outBf = jax.block_until_ready(
        attention_module_forward(embeddings, weight_matrix, bias,
                                 matmul_dtype=jnp.bfloat16))
    assert outBf.shape == (batch, f, 1), outBf.shape
    assert jnp.allclose(outBf, refB, rtol=1e-1, atol=5e-1), (outBf, refB)

    print("KERNEL_OK")
</pallas_src>

<mosaic_0001>
module attributes {stable_mosaic.version = 11 : i64} {
  func.func @_attention_kernel(%arg0: i32, %arg1: memref<1x16x16xf32, #tpu.memory_space<vmem>>, %arg2: memref<8x16x16xf32, #tpu.memory_space<vmem>>, %arg3: memref<1x8xf32, #tpu.memory_space<vmem>>, %arg4: memref<1x1x8xf32, #tpu.memory_space<vmem>>) attributes {dimension_semantics = [#tpu.dimension_semantics<parallel>], iteration_bounds = array<i64: 1>, scalar_prefetch = 0 : i64, scratch_operands = 0 : i64, tpu.core_type = #tpu.core_type<tc>, window_params = [{transform_indices = @transform_0, window_bounds = array<i64: 1, 16, 16>}, {pipeline_mode = #tpu.pipeline_mode<synchronous>, transform_indices = @transform_1, window_bounds = array<i64: 8, 16, 16>}, {pipeline_mode = #tpu.pipeline_mode<synchronous>, transform_indices = @transform_2, window_bounds = array<i64: 1, 8>}, {transform_indices = @transform_3, window_bounds = array<i64: 1, 1, 8>}]} {
    %c0 = arith.constant 0 : index
    %c0_0 = arith.constant 0 : index
    %c0_1 = arith.constant 0 : index
    %0 = vector.load %arg1[%c0, %c0_0, %c0_1] : memref<1x16x16xf32, #tpu.memory_space<vmem>>, vector<1x16x16xf32>
    %1 = vector.shape_cast %0 : vector<1x16x16xf32> to vector<16x16xf32>
    %c0_2 = arith.constant 0 : index
    %c0_3 = arith.constant 0 : index
    %c0_4 = arith.constant 0 : index
    %2 = vector.load %arg2[%c0_2, %c0_3, %c0_4] : memref<8x16x16xf32, #tpu.memory_space<vmem>>, vector<8x16x16xf32>
    %c0_5 = arith.constant 0 : index
    %c0_6 = arith.constant 0 : index
    %3 = vector.load %arg3[%c0_5, %c0_6] : memref<1x8xf32, #tpu.memory_space<vmem>>, vector<1x8xf32>
    %cst = arith.constant dense<0.000000e+00> : vector<8x16xf32>
    %4 = vector.multi_reduction <add>, %2, %cst [2] : vector<8x16x16xf32> to vector<8x16xf32>
    %cst_7 = arith.constant 1.600000e+01 : f32
    %5 = vector.broadcast %cst_7 : f32 to vector<8x16xf32>
    %6 = arith.divf %4, %5 : vector<8x16xf32>
    "tpu.trace_start"() <{level = 10 : i32, message = "im,km->ik"}> : () -> ()
    %cst_8 = arith.constant dense<0.000000e+00> : vector<16x8xf32>
    %7 = tpu.matmul %1, %6, %cst_8 {dimension_numbers = #tpu.dot_dimension_numbers<[1], [1], [0], [0], [0, 0, 1, 0], [], []>} : vector<16x16xf32>, vector<8x16xf32>, vector<16x8xf32> -> vector<16x8xf32>
    "tpu.trace_stop"() : () -> ()
    %8 = vector.broadcast %3 : vector<1x8xf32> to vector<16x8xf32>
    %9 = arith.addf %7, %8 : vector<16x8xf32>
    %10 = arith.negf %9 : vector<16x8xf32>
    %11 = math.exp %10 : vector<16x8xf32>
    %cst_9 = arith.constant 1.000000e+00 : f32
    %12 = vector.broadcast %cst_9 : f32 to vector<16x8xf32>
    %13 = arith.addf %12, %11 : vector<16x8xf32>
    %14 = arith.divf %12, %13 : vector<16x8xf32>
    %cst_10 = arith.constant dense<0.000000e+00> : vector<16x8xf32>
    %15 = tpu.matmul %1, %14, %cst_10 {dimension_numbers = #tpu.dot_dimension_numbers<[1], [0], [0], [1], [0, 0, 1, 1], [], []>} : vector<16x16xf32>, vector<16x8xf32>, vector<16x8xf32> -> vector<16x8xf32>
    %16 = arith.mulf %14, %15 : vector<16x8xf32>
    %cst_11 = arith.constant dense<0.000000e+00> : vector<8xf32>
    %17 = vector.multi_reduction <add>, %16, %cst_11 [0] : vector<16x8xf32> to vector<8xf32>
    %18 = vector.shape_cast %17 : vector<8xf32> to vector<1x8xf32>
    %c0_12 = arith.constant 0 : index
    %c0_13 = arith.constant 0 : index
    %c0_14 = arith.constant 0 : index
    %19 = vector.load %arg4[%c0_12, %c0_13, %c0_14] : memref<1x1x8xf32, #tpu.memory_space<vmem>>, vector<1x1x8xf32>
    %20 = vector.shape_cast %19 : vector<1x1x8xf32> to vector<1x8xf32>
    %21 = vector.shape_cast %18 : vector<1x8xf32> to vector<1x1x8xf32>
    tpu.vector_store %arg4[%c0_12, %c0_13, %c0_14], %21 {strides = array<i32>} : memref<1x1x8xf32, #tpu.memory_space<vmem>>, vector<1x1x8xf32>,
    return
  }
  func.func @transform_0(%arg0: i32) -> (i32, i32, i32) {
    %c0_i32 = arith.constant 0 : i32
    %c0_i32_0 = arith.constant 0 : i32
    %c0_i32_1 = arith.constant 0 : i32
    return %arg0, %c0_i32, %c0_i32_0 : i32, i32, i32
  }
  func.func @transform_1(%arg0: i32) -> (i32, i32, i32) {
    %c0_i32 = arith.constant 0 : i32
    %c0_i32_0 = arith.constant 0 : i32
    %c0_i32_1 = arith.constant 0 : i32
    %c0_i32_2 = arith.constant 0 : i32
    return %c0_i32, %c0_i32_0, %c0_i32_1 : i32, i32, i32
  }
  func.func @transform_2(%arg0: i32) -> (i32, i32) {
    %c0_i32 = arith.constant 0 : i32
    %c0_i32_0 = arith.constant 0 : i32
    %c0_i32_1 = arith.constant 0 : i32
    return %c0_i32, %c0_i32_0 : i32, i32
  }
  func.func @transform_3(%arg0: i32) -> (i32, i32, i32) {
    %c0_i32 = arith.constant 0 : i32
    %c0_i32_0 = arith.constant 0 : i32
    %c0_i32_1 = arith.constant 0 : i32
    return %arg0, %c0_i32, %c0_i32_0 : i32, i32, i32
  }
}

</mosaic_0001>

<llo_original>
// kernel: tpu_custom_call.1
$region0: #{tpu_custom_call.1}
  #allocation0 [shape = 'u32[]', space=smem, size = 0x4, offset = 0x4, fixed_abs, tag = 'smem constant byte address 0x4 - core index']
  #allocation1 [shape = 'u32[144,128]{1,0:T(1,128)}', space=vmem, size = 0x12000, scoped, tag = 'internal scratch']
  %s0 = inlined_call_operand.hbm [shape: f32[1,16,16], index: 0, kind: input, shape index: {}]
  %s1 = inlined_call_operand.hbm [shape: f32[8,16,16], index: 1, kind: input, shape index: {}]
  %s2 = inlined_call_operand.vmem [shape: f32[1,8], index: 2, kind: input, shape index: {}]
  %s3 = inlined_call_operand.hbm [shape: f32[1,1,8], index: 3, kind: output, shape index: {}]
  %s4 = sld [smem:[#allocation0]]
  $region30: #{tpu_custom_call.1} parent=0
    _
  %s6 = ssub.s32 1, %s4
  %s7 = scalar_select 0, %s6, %s4
  $region1: #{tpu_custom_call.1} parent=0
    #allocation2 [shape = 'u8[8192]{0}', space=vmem, size = 0x2000, scoped, tag = 'input window, operand 0, single buffered']
    #allocation3 [shape = 's32[1]{0}', space=sflag, size = 0x4, scoped, tag = 'scoped memory for tpu_custom_call.1']
    #allocation4 [shape = 's32[1]{0}', space=sflag, size = 0x4, scoped, tag = 'scoped memory for tpu_custom_call.1']
    #allocation5 [shape = 'u8[65536]{0}', space=vmem, size = 0x10000, scoped, tag = 'input window, operand 1, single buffered']
    #allocation6 [shape = 's32[1]{0}', space=sflag, size = 0x4, scoped, tag = 'scoped memory for tpu_custom_call.1']
    #allocation7 [shape = 'u8[512]{0}', space=vmem, size = 0x400, scoped, tag = 'output window, operand 0, single buffered']
    %8 = vsyncpa [#allocation3], 0
    %9 = vsyncpa [#allocation6], 0
    %10 = vsyncpa [#allocation4], 0
    // Predicated region
    $region2: #{tpu_custom_call.1} parent=1 // pred_check
      _
    $region3: #{tpu_custom_call.1} parent=1 // pred_check_branch
      %12 = sbr.rel (0) target = $region5
    $region4: #{tpu_custom_call.1} parent=1 // pred_region
      %s14 = ssub.s32 256, 256
      %15 = vsyncadd [#allocation3], %s14
      %s16 = sshll.u32 [#allocation2], 4
      %s17 = int_to_ptr.vmem [resolvable:$true] %s16
      %22 = dma.hbm_to_vmem [thread:$0]  %s0, 256, %s17, [#allocation3], 128, 128, 8
    $region5: #{tpu_custom_call.1} parent=1 // pred_fallthru
      _
    // Predicated region
    $region6: #{tpu_custom_call.1} parent=1 // pred_check
      _
    $region7: #{tpu_custom_call.1} parent=1 // pred_check_branch
      %24 = sbr.rel (0) target = $region9
    $region8: #{tpu_custom_call.1} parent=1 // pred_region
      %s26 = ssub.s32 2048, 2048
      %27 = vsyncadd [#allocation6], %s26
      %s28 = sshll.u32 [#allocation5], 4
      %s29 = int_to_ptr.vmem [resolvable:$true] %s28
      %34 = dma.hbm_to_vmem [thread:$0]  %s1, 2048, %s29, [#allocation6], 128, 128, 8
    $region9: #{tpu_custom_call.1} parent=1 // pred_fallthru
      _
    // Predicated region
    $region10: #{tpu_custom_call.1} parent=1 // pred_check
      _
    $region11: #{tpu_custom_call.1} parent=1 // pred_check_branch
      %36 = sbr.rel (0) target = $region13
    $region12: #{tpu_custom_call.1} parent=1 // pred_region
      _
    $region13: #{tpu_custom_call.1} parent=1 // pred_fallthru
      _
    // Predicated region
    $region14: #{tpu_custom_call.1} parent=1 // pred_check
      _
    $region15: #{tpu_custom_call.1} parent=1 // pred_check_branch
      %38 = sbr.rel (0) target = $region17
    $region16: #{tpu_custom_call.1} parent=1 // pred_region
      %39 = dma.done [#allocation3], 256
    $region17: #{tpu_custom_call.1} parent=1 // pred_fallthru
      _
    // Predicated region
    $region18: #{tpu_custom_call.1} parent=1 // pred_check
      _
    $region19: #{tpu_custom_call.1} parent=1 // pred_check_branch
      %41 = sbr.rel (0) target = $region21
    $region20: #{tpu_custom_call.1} parent=1 // pred_region
      %42 = dma.done [#allocation6], 2048
    $region21: #{tpu_custom_call.1} parent=1 // pred_fallthru
      _
    %v43 = vld [vmem:[#allocation2] sm:$0xff]
    %v44 = vld [vmem:[#allocation2 + $0x8] sm:$0xff]
    %v45 = vld [vmem:[#allocation5] sm:$0xff]
    %v46 = vld [vmem:[#allocation5 + $0x8] sm:$0xff]
    %v47 = vld [vmem:[#allocation5 + $0x10] sm:$0xff]
    %v48 = vld [vmem:[#allocation5 + $0x18] sm:$0xff]
    %v49 = vld [vmem:[#allocation5 + $0x20] sm:$0xff]
    %v50 = vld [vmem:[#allocation5 + $0x28] sm:$0xff]
    %v51 = vld [vmem:[#allocation5 + $0x30] sm:$0xff]
    %v52 = vld [vmem:[#allocation5 + $0x38] sm:$0xff]
    %v53 = vld [vmem:[#allocation5 + $0x40] sm:$0xff]
    %v54 = vld [vmem:[#allocation5 + $0x48] sm:$0xff]
    %v55 = vld [vmem:[#allocation5 + $0x50] sm:$0xff]
    %v56 = vld [vmem:[#allocation5 + $0x58] sm:$0xff]
    %v57 = vld [vmem:[#allocation5 + $0x60] sm:$0xff]
    %v58 = vld [vmem:[#allocation5 + $0x68] sm:$0xff]
    %v59 = vld [vmem:[#allocation5 + $0x70] sm:$0xff]
    %v60 = vld [vmem:[#allocation5 + $0x78] sm:$0xff]
    %v61 = vld [vmem:[%s2] sm:$0x1]
    %vm62 = vcmask 130048
    %v63 = vsel %vm62, %v45, 0.0
    %64 = vadd.xlane.f32.xlu0 %v63
    %v65 = vpop.xlane.xlu0 %64
    %v66 = vsel %vm62, %v46, 0.0
    %67 = vadd.xlane.f32.xlu0 %v66
    %v68 = vpop.xlane.xlu0 %67
    %v69 = vsel %vm62, %v47, 0.0
    %70 = vadd.xlane.f32.xlu0 %v69
    %v71 = vpop.xlane.xlu0 %70
    %v72 = vsel %vm62, %v48, 0.0
    %73 = vadd.xlane.f32.xlu0 %v72
    %v74 = vpop.xlane.xlu0 %73
    %v75 = vsel %vm62, %v49, 0.0
    %76 = vadd.xlane.f32.xlu0 %v75
    %v77 = vpop.xlane.xlu0 %76
    %v78 = vsel %vm62, %v50, 0.0
    %79 = vadd.xlane.f32.xlu0 %v78
    %v80 = vpop.xlane.xlu0 %79
    %v81 = vsel %vm62, %v51, 0.0
    %82 = vadd.xlane.f32.xlu0 %v81
    %v83 = vpop.xlane.xlu0 %82
    %v84 = vsel %vm62, %v52, 0.0
    %85 = vadd.xlane.f32.xlu0 %v84
    %v86 = vpop.xlane.xlu0 %85
    %v87 = vsel %vm62, %v53, 0.0
    %88 = vadd.xlane.f32.xlu0 %v87
    %v89 = vpop.xlane.xlu0 %88
    %v90 = vsel %vm62, %v54, 0.0
    %91 = vadd.xlane.f32.xlu0 %v90
    %v92 = vpop.xlane.xlu0 %91
    %v93 = vsel %vm62, %v55, 0.0
    %94 = vadd.xlane.f32.xlu0 %v93
    %v95 = vpop.xlane.xlu0 %94
    %v96 = vsel %vm62, %v56, 0.0
    %97 = vadd.xlane.f32.xlu0 %v96
    %v98 = vpop.xlane.xlu0 %97
    %v99 = vsel %vm62, %v57, 0.0
    %100 = vadd.xlane.f32.xlu0 %v99
    %v101 = vpop.xlane.xlu0 %100
    %v102 = vsel %vm62, %v58, 0.0
    %103 = vadd.xlane.f32.xlu0 %v102
    %v104 = vpop.xlane.xlu0 %103
    %v105 = vsel %vm62, %v59, 0.0
    %106 = vadd.xlane.f32.xlu0 %v105
    %v107 = vpop.xlane.xlu0 %106
    %v108 = vsel %vm62, %v60, 0.0
    %109 = vadd.xlane.f32.xlu0 %v108
    %v110 = vpop.xlane.xlu0 %109
    %v111 = vrcp.pop 16.0
    %v112 = vmul.f32 %v65, %v111
    %v113 = vmul.f32 %v68, %v111
    %v114 = vmul.f32 %v71, %v111
    %v115 = vmul.f32 %v74, %v111
    %v116 = vmul.f32 %v77, %v111
    %v117 = vmul.f32 %v80, %v111
    %v118 = vmul.f32 %v83, %v111
    %v119 = vmul.f32 %v86, %v111
    %v120 = vmul.f32 %v89, %v111
    %v121 = vmul.f32 %v92, %v111
    %v122 = vmul.f32 %v95, %v111
    %v123 = vmul.f32 %v98, %v111
    %v124 = vmul.f32 %v101, %v111
    %v125 = vmul.f32 %v104, %v111
    %v126 = vmul.f32 %v107, %v111
    %v127 = vmul.f32 %v110, %v111
    %v129 = vlaneseq
    %v130 = vshrl.u32 %v129, 7
    %v131 = vsub.s32 0, %v130
    %v132 = vrot.slane %v61, %v131
    %v150 = vlaneseq
    %v151 = vand.u32 %v150, 127
    %v152 = vlaneseq
    %v153 = vshrl.u32 %v152, 7
    %v154 = vsub.s32 %v151, %v153
    %v155 = vrot.slane %v112, %v154
    %v156 = vadd.s32 %v151, 4294967288
    %v157 = vlaneseq
    %v158 = vshrl.u32 %v157, 7
    %v159 = vsub.s32 %v156, %v158
    %v160 = vrot.slane %v113, %v159
    %vm161 = vcmask 130112
    %v162 = vsel %vm161, %v160, %v155
    %v163 = vlaneseq
    %v164 = vshrl.u32 %v163, 7
    %v165 = vsub.s32 %v151, %v164
    %v166 = vrot.slane %v114, %v165
    %v167 = vlaneseq
    %v168 = vshrl.u32 %v167, 7
    %v169 = vsub.s32 %v156, %v168
    %v170 = vrot.slane %v115, %v169
    %v171 = vsel %vm161, %v170, %v166
    %v172 = vlaneseq
    %v173 = vshrl.u32 %v172, 7
    %v174 = vsub.s32 %v151, %v173
    %v175 = vrot.slane %v116, %v174
    %v176 = vlaneseq
    %v177 = vshrl.u32 %v176, 7
    %v178 = vsub.s32 %v156, %v177
    %v179 = vrot.slane %v117, %v178
    %v180 = vsel %vm161, %v179, %v175
    %v181 = vlaneseq
    %v182 = vshrl.u32 %v181, 7
    %v183 = vsub.s32 %v151, %v182
    %v184 = vrot.slane %v118, %v183
    %v185 = vlaneseq
    %v186 = vshrl.u32 %v185, 7
    %v187 = vsub.s32 %v156, %v186
    %v188 = vrot.slane %v119, %v187
    %v189 = vsel %vm161, %v188, %v184
    %v190 = vlaneseq
    %v191 = vshrl.u32 %v190, 7
    %v192 = vsub.s32 %v151, %v191
    %v193 = vrot.slane %v120, %v192
    %v194 = vlaneseq
    %v195 = vshrl.u32 %v194, 7
    %v196 = vsub.s32 %v156, %v195
    %v197 = vrot.slane %v121, %v196
    %v198 = vsel %vm161, %v197, %v193
    %v199 = vlaneseq
    %v200 = vshrl.u32 %v199, 7
    %v201 = vsub.s32 %v151, %v200
    %v202 = vrot.slane %v122, %v201
    %v203 = vlaneseq
    %v204 = vshrl.u32 %v203, 7
    %v205 = vsub.s32 %v156, %v204
    %v206 = vrot.slane %v123, %v205
    %v207 = vsel %vm161, %v206, %v202
    %v208 = vlaneseq
    %v209 = vshrl.u32 %v208, 7
    %v210 = vsub.s32 %v151, %v209
    %v211 = vrot.slane %v124, %v210
    %v212 = vlaneseq
    %v213 = vshrl.u32 %v212, 7
    %v214 = vsub.s32 %v156, %v213
    %v215 = vrot.slane %v125, %v214
    %v216 = vsel %vm161, %v215, %v211
    %v217 = vlaneseq
    %v218 = vshrl.u32 %v217, 7
    %v219 = vsub.s32 %v151, %v218
    %v220 = vrot.slane %v126, %v219
    %v221 = vlaneseq
    %v222 = vshrl.u32 %v221, 7
    %v223 = vsub.s32 %v156, %v222
    %v224 = vrot.slane %v127, %v223
    %v225 = vsel %vm161, %v224, %v220
    %vm226 = vcmask 1041409
    %v227 = vsel %vm226, %v171, %v162
    %vm228 = vcmask 1042434
    %v229 = vsel %vm228, %v180, %v227
    %vm230 = vcmask 1043459
    %v231 = vsel %vm230, %v189, %v229
    %vm232 = vcmask 1044484
    %v233 = vsel %vm232, %v198, %v231
    %vm234 = vcmask 1045509
    %v235 = vsel %vm234, %v207, %v233
    %vm236 = vcmask 1046534
    %v237 = vsel %vm236, %v216, %v235
    %vm238 = vcmask 1047559
    %v239 = vsel %vm238, %v225, %v237
    %v241 = vsel %vm62, %v43, 0
    %v244 = vsel %vm62, %v44, 0
    %v246 = vsel %vm62, %v239, 0
    %248 = vmatprep.subr.mxu0 0.0
    %249 = vmatpush1.xpose.msra.mxu0 %v246
    %250 = vmatprep.subr.mxu0 0.0
    %251 = vmatpush1.xpose.msra.mxu0 0.0
    %252 = vmatprep.subr.mxu0 0.0
    %253 = vmatpush1.xpose.msra.mxu0 0.0
    %254 = vmatprep.subr.mxu0 0.0
    %255 = vmatpush1.xpose.msra.mxu0 0.0
    %256 = vmatprep.subr.mxu0 0.0
    %257 = vmatpush1.xpose.msra.mxu0 0.0
    %258 = vmatprep.subr.mxu0 0.0
    %259 = vmatpush1.xpose.msra.mxu0 0.0
    %260 = vmatprep.subr.mxu0 0.0
    %261 = vmatpush1.xpose.msra.mxu0 0.0
    %262 = vmatprep.subr.mxu0 0.0
    %263 = vmatpush1.xpose.msra.mxu0 0.0
    %264 = vmatprep.subr.mxu0 0.0
    %265 = vmatpush1.xpose.msra.mxu0 0.0
    %266 = vmatprep.subr.mxu0 0.0
    %267 = vmatpush1.xpose.msra.mxu0 0.0
    %268 = vmatprep.subr.mxu0 0.0
    %269 = vmatpush1.xpose.msra.mxu0 0.0
    %270 = vmatprep.subr.mxu0 0.0
    %271 = vmatpush1.xpose.msra.mxu0 0.0
    %272 = vmatprep.subr.mxu0 0.0
    %273 = vmatpush1.xpose.msra.mxu0 0.0
    %274 = vmatprep.subr.mxu0 0.0
    %275 = vmatpush1.xpose.msra.mxu0 0.0
    %276 = vmatprep.subr.mxu0 0.0
    %277 = vmatpush1.xpose.msra.mxu0 0.0
    %278 = vmatprep.subr.mxu0 0.0
    %279 = vmatpush1.xpose.msra.mxu0 0.0
    %280 = vmatprep.subr.mxu0 0.0
    %281 = vmatpush1.xpose.msra.mxu0 0.0
    %282 = vmatprep.subr.mxu0 0.0
    %283 = vmatpush1.xpose.msra.mxu0 0.0
    %284 = vmatprep.subr.mxu0 0.0
    %285 = vmatpush1.xpose.msra.mxu0 0.0
    %286 = vmatprep.subr.mxu0 0.0
    %287 = vmatpush1.xpose.msra.mxu0 0.0
    %288 = vmatprep.subr.mxu0 0.0
    %289 = vmatpush1.xpose.msra.mxu0 0.0
    %290 = vmatprep.subr.mxu0 0.0
    %291 = vmatpush1.xpose.msra.mxu0 0.0
    %292 = vmatprep.subr.mxu0 0.0
    %293 = vmatpush1.xpose.msra.mxu0 0.0
    %294 = vmatprep.subr.mxu0 0.0
    %295 = vmatpush1.xpose.msra.mxu0 0.0
    %296 = vmatprep.subr.mxu0 0.0
    %297 = vmatpush1.xpose.msra.mxu0 0.0
    %298 = vmatprep.subr.mxu0 0.0
    %299 = vmatpush1.xpose.msra.mxu0 0.0
    %300 = vmatprep.subr.mxu0 0.0
    %301 = vmatpush1.xpose.msra.mxu0 0.0
    %302 = vmatprep.subr.mxu0 0.0
    %303 = vmatpush1.xpose.msra.mxu0 0.0
    %304 = vmatprep.subr.mxu0 0.0
    %305 = vmatpush1.xpose.msra.mxu0 0.0
    %306 = vmatprep.subr.mxu0 0.0
    %307 = vmatpush1.xpose.msra.mxu0 0.0
    %308 = vmatprep.subr.mxu0 0.0
    %309 = vmatpush1.xpose.msra.mxu0 0.0
    %310 = vmatprep.subr.mxu0 0.0
    %311 = vmatpush1.xpose.msra.mxu0 0.0
    %312 = vmatprep.mubr.f32.mxu0 0.0
    %313 = vmatmul.mubr.f32.gmra.mrb[0].mxu0 %v241
    %v314 = vpop.f32.mrb[0].mxu0
    %v315 = vadd.f32 %v132, %v314
    %v316 = vpop.f32.mrb[0].mxu0
    %317 = vmatprep.mubr.f32.mxu0 0.0
    %318 = vmatmul.mubr.f32.gmra.mrb[0].mxu0 %v244
    %v319 = vpop.f32.mrb[0].mxu0
    %v320 = vadd.f32 %v132, %v319
    %v321 = vpop.f32.mrb[0].mxu0
    %322 = vdwg.mxu0
    %v323 = vxor.u32 %v315, 2147483648
    %v324 = vxor.u32 %v320, 2147483648
    %v325 = vmul.f32 %v323, 1.442695
    %v326 = vpow.pop %v325
    %v327 = vmul.f32 %v324, 1.442695
    %v328 = vpow.pop %v327
    %v329 = vadd.f32 %v326, 1.0
    %v330 = vadd.f32 %v328, 1.0
    %v331 = vrcp.pop %v329
    %v332 = vmul.f32 1.0, %v331
    %v333 = vrcp.pop %v330
    %v334 = vmul.f32 1.0, %v333
    %335 = vmatprep.subr.mxu0 0.0
    %336 = vmatpush1.msra.mxu0 %v332
    %337 = vmatprep.subr.mxu0 0.0
    %338 = vmatpush1.msra.mxu0 %v334
    %339 = vmatprep.subr.mxu0 0.0
    %340 = vmatpush1.msra.mxu0 0.0
    %341 = vmatprep.subr.mxu0 0.0
    %342 = vmatpush1.msra.mxu0 0.0
    %343 = vmatprep.subr.mxu0 0.0
    %344 = vmatpush1.msra.mxu0 0.0
    %345 = vmatprep.subr.mxu0 0.0
    %346 = vmatpush1.msra.mxu0 0.0
    %347 = vmatprep.subr.mxu0 0.0
    %348 = vmatpush1.msra.mxu0 0.0
    %349 = vmatprep.subr.mxu0 0.0
    %350 = vmatpush1.msra.mxu0 0.0
    %351 = vmatprep.subr.mxu0 0.0
    %352 = vmatpush1.msra.mxu0 0.0
    %353 = vmatprep.subr.mxu0 0.0
    %354 = vmatpush1.msra.mxu0 0.0
    %355 = vmatprep.subr.mxu0 0.0
    %356 = vmatpush1.msra.mxu0 0.0
    %357 = vmatprep.subr.mxu0 0.0
    %358 = vmatpush1.msra.mxu0 0.0
    %359 = vmatprep.subr.mxu0 0.0
    %360 = vmatpush1.msra.mxu0 0.0
    %361 = vmatprep.subr.mxu0 0.0
    %362 = vmatpush1.msra.mxu0 0.0
    %363 = vmatprep.subr.mxu0 0.0
    %364 = vmatpush1.msra.mxu0 0.0
    %365 = vmatprep.subr.mxu0 0.0
    %366 = vmatpush1.msra.mxu0 0.0
    %367 = vmatprep.subr.mxu0 0.0
    %368 = vmatpush1.msra.mxu0 0.0
    %369 = vmatprep.subr.mxu0 0.0
    %370 = vmatpush1.msra.mxu0 0.0
    %371 = vmatprep.subr.mxu0 0.0
    %372 = vmatpush1.msra.mxu0 0.0
    %373 = vmatprep.subr.mxu0 0.0
    %374 = vmatpush1.msra.mxu0 0.0
    %375 = vmatprep.subr.mxu0 0.0
    %376 = vmatpush1.msra.mxu0 0.0
    %377 = vmatprep.subr.mxu0 0.0
    %378 = vmatpush1.msra.mxu0 0.0
    %379 = vmatprep.subr.mxu0 0.0
    %380 = vmatpush1.msra.mxu0 0.0
    %381 = vmatprep.subr.mxu0 0.0
    %382 = vmatpush1.msra.mxu0 0.0
    %383 = vmatprep.subr.mxu0 0.0
    %384 = vmatpush1.msra.mxu0 0.0
    %385 = vmatprep.subr.mxu0 0.0
    %386 = vmatpush1.msra.mxu0 0.0
    %387 = vmatprep.subr.mxu0 0.0
    %388 = vmatpush1.msra.mxu0 0.0
    %389 = vmatprep.subr.mxu0 0.0
    %390 = vmatpush1.msra.mxu0 0.0
    %391 = vmatprep.subr.mxu0 0.0
    %392 = vmatpush1.msra.mxu0 0.0
    %393 = vmatprep.subr.mxu0 0.0
    %394 = vmatpush1.msra.mxu0 0.0
    %395 = vmatprep.subr.mxu0 0.0
    %396 = vmatpush1.msra.mxu0 0.0
    %397 = vmatprep.subr.mxu0 0.0
    %398 = vmatpush1.msra.mxu0 0.0
    %399 = vmatprep.mubr.f32.mxu0 0.0
    %400 = vmatmul.mubr.f32.gmra.mrb[0].mxu0 %v241
    %v401 = vpop.f32.mrb[0].mxu0
    %v402 = vadd.f32 0.0, %v401
    %v403 = vpop.f32.mrb[0].mxu0
    %404 = vmatprep.mubr.f32.mxu0 0.0
    %405 = vmatmul.mubr.f32.gmra.mrb[0].mxu0 %v244
    %v406 = vpop.f32.mrb[0].mxu0
    %v407 = vadd.f32 0.0, %v406
    %v408 = vpop.f32.mrb[0].mxu0
    %409 = vdwg.mxu0
    %v410 = vmul.f32 %v332, %v402
    %v411 = vmul.f32 %v334, %v407
    %vm412 = vcmask 64512
    %v413 = vsel %vm412, %v410, 0.0
    %v414 = vsel %vm412, %v411, 0.0
    %v415 = vadd.f32 %v413, %v414
    %v416 = vrot.slane %v415, 4
    %v417 = vadd.f32 %v415, %v416
    %v418 = vrot.slane %v417, 2
    %v419 = vadd.f32 %v417, %v418
    %v420 = vrot.slane %v419, 1
    %v421 = vadd.f32 %v419, %v420
    %vm422 = vcmask 57344
    %423 = vst.msk [vmem:[#allocation7] sm:$0x1] %vm422, %v421
    // Predicated region
    $region22: #{tpu_custom_call.1} parent=1 // pred_check
      _
    $region23: #{tpu_custom_call.1} parent=1 // pred_check_branch
      %425 = sbr.rel (0) target = $region25
    $region24: #{tpu_custom_call.1} parent=1 // pred_region
      %s427 = ssub.s32 16, 16
      %428 = vsyncadd [#allocation4], %s427
      %s430 = sshll.u32 [#allocation7], 4
      %s431 = int_to_ptr.vmem [resolvable:$true] %s430
      %433 = dma.vmem_to_hbm [thread:$0]  %s431, 16, %s3, [#allocation4]
    $region25: #{tpu_custom_call.1} parent=1 // pred_fallthru
      _
    // Predicated region
    $region26: #{tpu_custom_call.1} parent=1 // pred_check
      _
    $region27: #{tpu_custom_call.1} parent=1 // pred_check_branch
      %435 = sbr.rel (0) target = $region29
    $region28: #{tpu_custom_call.1} parent=1 // pred_region
      %436 = dma.done [#allocation4], 16
    $region29: #{tpu_custom_call.1} parent=1 // pred_fallthru
      _
    %437 = vsyncpa [#allocation3], 1
    %438 = vsyncpa [#allocation6], 1
    %439 = vsyncpa [#allocation4], 1

</llo_original>
